<compile_context>
chip_gen: v5e
topology: v5e:2x2
jax: 0.10.0
libtpu: 0.0.40
codegen_flags: <defaults>
</compile_context>

<pallas_src>
import functools

import jax
import jax.numpy as jnp
from jax.experimental import pallas as pl
from jax.experimental.pallas import tpu as pltpu

H1 = 64   # fc1 out features
H2 = 96   # fc2 out features


def _round_up(n, m):
    return ((n + m - 1) // m) * m


def mlp_kernel(x_ref, w1_ref, b1_ref, w2_ref, b2_ref, o_ref):
    # Fused 2-layer MLP. x arrives f32 and is cast to bf16 in-kernel (free VPU filler).
    x = x_ref[...].astype(jnp.bfloat16)                                # (TB, d_in)
    h = jnp.dot(x, w1_ref[...], preferred_element_type=jnp.float32)    # (TB, 64) f32 acc
    h = jnp.maximum(h + b1_ref[...], 0.0)
    y = jnp.dot(h.astype(jnp.bfloat16), w2_ref[...],
                preferred_element_type=jnp.float32)                    # (TB, 96) f32 acc
    y = jnp.maximum(y + b2_ref[...], 0.0)
    o_ref[...] = y.astype(o_ref.dtype)


def prepare_params(w1, b1, w2, b2):
    """One-time parameter prep (hoisted out of the per-call path).

    Weights are expected pre-transposed to (in, out); they are cast to bf16 once.
    Biases stay f32, shaped (1, H) for broadcasting inside the kernel.
    """
    return (w1.astype(jnp.bfloat16),
            jnp.asarray(b1, jnp.float32).reshape(1, H1),
            w2.astype(jnp.bfloat16),
            jnp.asarray(b2, jnp.float32).reshape(1, H2))


@functools.partial(jax.jit, static_argnames=("tb_max", "out_dtype"))
def mlp_forward(x, w1b, b1, w2b, b2, *, tb_max=4096, out_dtype=jnp.float32):
    """x: (B, 1, input_size) float32.  Returns (B, 96) `out_dtype` (post-squeeze(1))."""
    B, one, d_in = x.shape
    assert one == 1, "module squeezes dim 1; expected a size-1 middle axis"
    x2d = x.reshape(B, d_in)   # metadata-only reshape; implements the squeeze(1)

    # ---- choose the batch tile TB (static, from shapes only) --------------------
    out_bytes = jnp.dtype(out_dtype).itemsize
    # VMEM budget for the double-buffered x and out tiles (weights are tiny and
    # VMEM-resident); 20 MiB keeps us under the 32 MiB limit on every generation.
    budget = 20 * 1024 * 1024
    per_row = 2 * (4 * d_in + out_bytes * H2)
    tb = max(8, min(tb_max, (budget // per_row) // 8 * 8))
    tb = min(tb, _round_up(B, 8))            # don't allocate a tile bigger than B
    # Ensure >=2 grid steps for large-enough B so v7x megacore can split the batch.
    if pl.cdiv(B, tb) < 2 and B >= 256:
        tb = max(8, _round_up(pl.cdiv(B, 2), 8))

    grid = (pl.cdiv(B, tb),)                 # ragged last block: OOB writes masked

    out = pl.pallas_call(
        mlp_kernel,
        out_shape=jax.ShapeDtypeStruct((B, H2), out_dtype),
        grid_spec=pltpu.PrefetchScalarGridSpec(
            num_scalar_prefetch=0,
            grid=grid,
            in_specs=[
                pl.BlockSpec((tb, d_in), lambda i: (i, 0)),   # x: tiled over batch
                pl.BlockSpec((d_in, H1), lambda i: (0, 0)),   # weights VMEM-resident
                pl.BlockSpec((1, H1), lambda i: (0, 0)),
                pl.BlockSpec((H1, H2), lambda i: (0, 0)),
                pl.BlockSpec((1, H2), lambda i: (0, 0)),
            ],
            out_specs=pl.BlockSpec((tb, H2), lambda i: (i, 0)),  # 96 == full last dim
        ),
        compiler_params=pltpu.CompilerParams(
            dimension_semantics=("parallel",),     # v7x megacore batch sharding
            vmem_limit_bytes=32 * 1024 * 1024,
        ),
    )(x2d, w1b, b1, w2b, b2)
    return out


def init_params(key, input_size):
    """PyTorch-like uniform fan-in init. Weights pre-transposed: (in, out)."""
    k1, k2, k3, k4 = jax.random.split(key, 4)
    bound1 = 1.0 / jnp.sqrt(input_size)
    bound2 = 1.0 / jnp.sqrt(64.0)
    w1 = jax.random.uniform(k1, (input_size, 64), jnp.float32, -bound1, bound1)
    b1 = jax.random.uniform(k2, (1, 64), jnp.float32, -bound1, bound1)
    w2 = jax.random.uniform(k3, (64, 96), jnp.float32, -bound2, bound2)
    b2 = jax.random.uniform(k4, (1, 96), jnp.float32, -bound2, bound2)
    return w1, b1, w2, b2


if __name__ == "__main__":
    key = jax.random.PRNGKey(0)
    kx, kp = jax.random.split(key)

    batch = 2
    input_size = 32
    x = jax.random.normal(kx, (batch, 1, input_size), dtype=jnp.float32)

    w1, b1, w2, b2 = init_params(kp, input_size)
    w1b, b1p, w2b, b2p = prepare_params(w1, b1, w2, b2)   # one-time prep

    out = jax.block_until_ready(mlp_forward(x, w1b, b1p, w2b, b2p))

    # Reference in plain JAX with matching bf16-matmul / f32-accumulate numerics.
    xb = x.reshape(batch, input_size).astype(jnp.bfloat16)
    ref = jnp.maximum(
        jnp.dot(xb, w1.astype(jnp.bfloat16), preferred_element_type=jnp.float32) + b1, 0.0)
    ref = jnp.maximum(
        jnp.dot(ref.astype(jnp.bfloat16), w2.astype(jnp.bfloat16),
                preferred_element_type=jnp.float32) + b2, 0.0)

    assert out.shape == (batch, 96)
    assert out.dtype == jnp.float32
    assert jnp.allclose(out, ref, atol=5e-2, rtol=5e-2)

    print("KERNEL_OK")
</pallas_src>

<mosaic_0001>
module attributes {stable_mosaic.version = 11 : i64} {
  func.func @mlp_kernel(%arg0: i32, %arg1: memref<8x32xf32, #tpu.memory_space<vmem>>, %arg2: memref<32x64xbf16, #tpu.memory_space<vmem>>, %arg3: memref<1x64xf32, #tpu.memory_space<vmem>>, %arg4: memref<64x96xbf16, #tpu.memory_space<vmem>>, %arg5: memref<1x96xf32, #tpu.memory_space<vmem>>, %arg6: memref<8x96xf32, #tpu.memory_space<vmem>>) attributes {dimension_semantics = [#tpu.dimension_semantics<parallel>], iteration_bounds = array<i64: 1>, scalar_prefetch = 0 : i64, scratch_operands = 0 : i64, tpu.core_type = #tpu.core_type<tc>, window_params = [{transform_indices = @transform_0, window_bounds = array<i64: 8, 32>}, {pipeline_mode = #tpu.pipeline_mode<synchronous>, transform_indices = @transform_1, window_bounds = array<i64: 32, 64>}, {pipeline_mode = #tpu.pipeline_mode<synchronous>, transform_indices = @transform_2, window_bounds = array<i64: 1, 64>}, {pipeline_mode = #tpu.pipeline_mode<synchronous>, transform_indices = @transform_3, window_bounds = array<i64: 64, 96>}, {pipeline_mode = #tpu.pipeline_mode<synchronous>, transform_indices = @transform_4, window_bounds = array<i64: 1, 96>}, {transform_indices = @transform_5, window_bounds = array<i64: 8, 96>}]} {
    %c0 = arith.constant 0 : index
    %c0_0 = arith.constant 0 : index
    %0 = vector.load %arg1[%c0, %c0_0] : memref<8x32xf32, #tpu.memory_space<vmem>>, vector<8x32xf32>
    %1 = arith.truncf %0 : vector<8x32xf32> to vector<8x32xbf16>
    %c0_1 = arith.constant 0 : index
    %c0_2 = arith.constant 0 : index
    %2 = vector.load %arg2[%c0_1, %c0_2] : memref<32x64xbf16, #tpu.memory_space<vmem>>, vector<32x64xbf16>
    %cst = arith.constant dense<0.000000e+00> : vector<8x64xf32>
    %3 = tpu.matmul %1, %2, %cst {dimension_numbers = #tpu.dot_dimension_numbers<[1], [0], [0], [1], [0, 0, 1, 1], [], []>} : vector<8x32xbf16>, vector<32x64xbf16>, vector<8x64xf32> -> vector<8x64xf32>
    %c0_3 = arith.constant 0 : index
    %c0_4 = arith.constant 0 : index
    %4 = vector.load %arg3[%c0_3, %c0_4] : memref<1x64xf32, #tpu.memory_space<vmem>>, vector<1x64xf32>
    %5 = vector.broadcast %4 : vector<1x64xf32> to vector<8x64xf32>
    %6 = arith.addf %3, %5 : vector<8x64xf32>
    %cst_5 = arith.constant 0.000000e+00 : f32
    %7 = vector.broadcast %cst_5 : f32 to vector<8x64xf32>
    %8 = arith.maximumf %6, %7 : vector<8x64xf32>
    %9 = arith.truncf %8 : vector<8x64xf32> to vector<8x64xbf16>
    %c0_6 = arith.constant 0 : index
    %c0_7 = arith.constant 0 : index
    %10 = vector.load %arg4[%c0_6, %c0_7] : memref<64x96xbf16, #tpu.memory_space<vmem>>, vector<64x96xbf16>
    %cst_8 = arith.constant dense<0.000000e+00> : vector<8x96xf32>
    %11 = tpu.matmul %9, %10, %cst_8 {dimension_numbers = #tpu.dot_dimension_numbers<[1], [0], [0], [1], [0, 0, 1, 1], [], []>} : vector<8x64xbf16>, vector<64x96xbf16>, vector<8x96xf32> -> vector<8x96xf32>
    %c0_9 = arith.constant 0 : index
    %c0_10 = arith.constant 0 : index
    %12 = vector.load %arg5[%c0_9, %c0_10] : memref<1x96xf32, #tpu.memory_space<vmem>>, vector<1x96xf32>
    %13 = vector.broadcast %12 : vector<1x96xf32> to vector<8x96xf32>
    %14 = arith.addf %11, %13 : vector<8x96xf32>
    %cst_11 = arith.constant 0.000000e+00 : f32
    %15 = vector.broadcast %cst_11 : f32 to vector<8x96xf32>
    %16 = arith.maximumf %14, %15 : vector<8x96xf32>
    %c0_12 = arith.constant 0 : index
    %c0_13 = arith.constant 0 : index
    %17 = vector.load %arg6[%c0_12, %c0_13] : memref<8x96xf32, #tpu.memory_space<vmem>>, vector<8x96xf32>
    tpu.vector_store %arg6[%c0_12, %c0_13], %16 {strides = array<i32>} : memref<8x96xf32, #tpu.memory_space<vmem>>, vector<8x96xf32>,
    return
  }
  func.func @transform_0(%arg0: i32) -> (i32, i32) {
    %c0_i32 = arith.constant 0 : i32
    %c0_i32_0 = arith.constant 0 : i32
    return %arg0, %c0_i32 : i32, i32
  }
  func.func @transform_1(%arg0: i32) -> (i32, i32) {
    %c0_i32 = arith.constant 0 : i32
    %c0_i32_0 = arith.constant 0 : i32
    %c0_i32_1 = arith.constant 0 : i32
    return %c0_i32, %c0_i32_0 : i32, i32
  }
  func.func @transform_2(%arg0: i32) -> (i32, i32) {
    %c0_i32 = arith.constant 0 : i32
    %c0_i32_0 = arith.constant 0 : i32
    %c0_i32_1 = arith.constant 0 : i32
    return %c0_i32, %c0_i32_0 : i32, i32
  }
  func.func @transform_3(%arg0: i32) -> (i32, i32) {
    %c0_i32 = arith.constant 0 : i32
    %c0_i32_0 = arith.constant 0 : i32
    %c0_i32_1 = arith.constant 0 : i32
    return %c0_i32, %c0_i32_0 : i32, i32
  }
  func.func @transform_4(%arg0: i32) -> (i32, i32) {
    %c0_i32 = arith.constant 0 : i32
    %c0_i32_0 = arith.constant 0 : i32
    %c0_i32_1 = arith.constant 0 : i32
    return %c0_i32, %c0_i32_0 : i32, i32
  }
  func.func @transform_5(%arg0: i32) -> (i32, i32) {
    %c0_i32 = arith.constant 0 : i32
    %c0_i32_0 = arith.constant 0 : i32
    return %arg0, %c0_i32 : i32, i32
  }
}

</mosaic_0001>

<llo_original>
// kernel: mlp_forward.1
$region0: #{mlp_forward.1}
  #allocation0 [shape = 'u32[]', space=smem, size = 0x4, offset = 0x4, fixed_abs, tag = 'smem constant byte address 0x4 - core index']
  #allocation1 [shape = 'u32[72,128]{1,0:T(1,128)}', space=vmem, size = 0x9000, scoped, tag = 'internal scratch']
  %s0 = inlined_call_operand.hbm [shape: f32[2,32], index: 0, kind: input, shape index: {}]
  %s1 = inlined_call_operand.hbm [shape: bf16[32,64], index: 1, kind: input, shape index: {}]
  %s2 = inlined_call_operand.vmem [shape: f32[1,64], index: 2, kind: input, shape index: {}]
  %s3 = inlined_call_operand.hbm [shape: bf16[64,96], index: 3, kind: input, shape index: {}]
  %s4 = inlined_call_operand.vmem [shape: f32[1,96], index: 4, kind: input, shape index: {}]
  %s5 = inlined_call_operand.hbm [shape: f32[2,96], index: 5, kind: output, shape index: {}]
  %s6 = sld [smem:[#allocation0]]
  $region42: #{mlp_forward.1} parent=0
    _
  %s8 = ssub.s32 1, %s6
  %s9 = scalar_select 0, %s8, %s6
  $region1: #{mlp_forward.1} parent=0
    #allocation2 [shape = 'u8[4096]{0}', space=vmem, size = 0x1000, scoped, tag = 'input window, operand 0, single buffered']
    #allocation3 [shape = 's32[1]{0}', space=sflag, size = 0x4, scoped, tag = 'scoped memory for mlp_forward.1']
    #allocation4 [shape = 's32[1]{0}', space=sflag, size = 0x4, scoped, tag = 'scoped memory for mlp_forward.1']
    #allocation5 [shape = 'u8[8192]{0}', space=vmem, size = 0x2000, scoped, tag = 'input window, operand 1, single buffered']
    #allocation6 [shape = 's32[1]{0}', space=sflag, size = 0x4, scoped, tag = 'scoped memory for mlp_forward.1']
    #allocation7 [shape = 'u8[16384]{0}', space=vmem, size = 0x4000, scoped, tag = 'input window, operand 3, single buffered']
    #allocation8 [shape = 'u8[4096]{0}', space=vmem, size = 0x1000, scoped, tag = 'output window, operand 0, single buffered']
    %10 = vsyncpa [#allocation3], 0
    %11 = vsyncpa [#allocation6], 0
    %12 = vsyncpa [#allocation4], 0
    // Predicated region
    $region2: #{mlp_forward.1} parent=1 // pred_check
      _
    $region3: #{mlp_forward.1} parent=1 // pred_check_branch
      %14 = sbr.rel (0) target = $region5
    $region4: #{mlp_forward.1} parent=1 // pred_region
      %16 = vsyncadd [#allocation3], 96
      %s17 = sshll.u32 %s0, 4
      %s18 = int_to_ptr.hbm [resolvable:$true] %s17
      %s19 = sshll.u32 [#allocation2], 4
      %s20 = int_to_ptr.vmem [resolvable:$true] %s19
      %25 = dma.hbm_to_vmem [thread:$0]  %s18, 32, %s20, [#allocation3], 32, 32, 2
    $region5: #{mlp_forward.1} parent=1 // pred_fallthru
      _
    // Predicated region
    $region6: #{mlp_forward.1} parent=1 // pred_check
      _
    $region7: #{mlp_forward.1} parent=1 // pred_check_branch
      %27 = sbr.rel (0) target = $region9
    $region8: #{mlp_forward.1} parent=1 // pred_region
      %29 = vsyncadd [#allocation6], 0
      %s30 = sshll.u32 %s1, 4
      %s31 = int_to_ptr.hbm [resolvable:$true] %s30
      %s32 = sshll.u32 [#allocation5], 4
      %s33 = int_to_ptr.vmem [resolvable:$true] %s32
      %38 = dma.hbm_to_vmem [thread:$0]  %s31, 256, %s33, [#allocation6], 64, 64, 4
    $region9: #{mlp_forward.1} parent=1 // pred_fallthru
      _
    // Predicated region
    $region10: #{mlp_forward.1} parent=1 // pred_check
      _
    $region11: #{mlp_forward.1} parent=1 // pred_check_branch
      %40 = sbr.rel (0) target = $region13
    $region12: #{mlp_forward.1} parent=1 // pred_region
      _
    $region13: #{mlp_forward.1} parent=1 // pred_fallthru
      _
    // Predicated region
    $region14: #{mlp_forward.1} parent=1 // pred_check
      _
    $region15: #{mlp_forward.1} parent=1 // pred_check_branch
      %42 = sbr.rel (0) target = $region17
    $region16: #{mlp_forward.1} parent=1 // pred_region
      %44 = vsyncadd [#allocation6], 0
      %s45 = sshll.u32 %s3, 4
      %s46 = int_to_ptr.hbm [resolvable:$true] %s45
      %s47 = sshll.u32 [#allocation7], 4
      %s48 = int_to_ptr.vmem [resolvable:$true] %s47
      %53 = dma.hbm_to_vmem [thread:$0]  %s46, 512, %s48, [#allocation6], 64, 64, 4
    $region17: #{mlp_forward.1} parent=1 // pred_fallthru
      _
    // Predicated region
    $region18: #{mlp_forward.1} parent=1 // pred_check
      _
    $region19: #{mlp_forward.1} parent=1 // pred_check_branch
      %55 = sbr.rel (0) target = $region21
    $region20: #{mlp_forward.1} parent=1 // pred_region
      _
    $region21: #{mlp_forward.1} parent=1 // pred_fallthru
      _
    // Predicated region
    $region22: #{mlp_forward.1} parent=1 // pred_check
      _
    $region23: #{mlp_forward.1} parent=1 // pred_check_branch
      %57 = sbr.rel (0) target = $region25
    $region24: #{mlp_forward.1} parent=1 // pred_region
      %59 = dma.done [#allocation3], 128
    $region25: #{mlp_forward.1} parent=1 // pred_fallthru
      _
    // Predicated region
    $region26: #{mlp_forward.1} parent=1 // pred_check
      _
    $region27: #{mlp_forward.1} parent=1 // pred_check_branch
      %61 = sbr.rel (0) target = $region29
    $region28: #{mlp_forward.1} parent=1 // pred_region
      %63 = dma.done [#allocation6], 256
    $region29: #{mlp_forward.1} parent=1 // pred_fallthru
      _
    // Predicated region
    $region30: #{mlp_forward.1} parent=1 // pred_check
      _
    $region31: #{mlp_forward.1} parent=1 // pred_check_branch
      %65 = sbr.rel (0) target = $region33
    $region32: #{mlp_forward.1} parent=1 // pred_region
      %67 = dma.done [#allocation6], 512
    $region33: #{mlp_forward.1} parent=1 // pred_fallthru
      _
    %v69 = vld [vmem:[#allocation2] sm:$0xff]
    %v70 = vpack.c.bf16 %v69, %v69
    %v71 = vld [vmem:[#allocation5] sm:$0xf]
    %v72 = vld [vmem:[#allocation5 + $0x4] sm:$0xf]
    %v73 = vld [vmem:[#allocation5 + $0x8] sm:$0xf]
    %v74 = vld [vmem:[#allocation5 + $0xc] sm:$0xf]
    %v75 = vld [vmem:[%s2] sm:$0x1]
    %v77 = vperm.slane %v75, 0
    %v83 = vunpack.c.l.b16 %v71
    %v84 = vunpack.c.l.b16 %v72
    %v85 = vunpack.c.l.b16 %v73
    %v86 = vunpack.c.l.b16 %v74
    %v87 = vpack.c.b16 %v84, %v83
    %v88 = vpack.c.b16 %v86, %v85
    %vm91 = vcmask 261120
    %v93 = vsel %vm91, %v70, 0
    %95 = vmatpush.bf16.msra.mxu0 0
    %96 = vmatpush.bf16.msra.mxu0 0
    %97 = vmatpush.bf16.msra.mxu0 0
    %98 = vmatpush.bf16.msra.mxu0 0
    %99 = vmatpush.bf16.msra.mxu0 0
    %100 = vmatpush.bf16.msra.mxu0 0
    %101 = vmatpush.bf16.msra.mxu0 %v88
    %102 = vmatpush.bf16.msra.mxu0 %v87
    %103 = vmatmul.bf16.gmra.mxu0 %v93
    %v104 = vpop.f32.mrf.mxu0
    %v105 = vadd.f32 %v77, %v104
    %v106 = vpop.f32.mrf.mxu0
    %107 = vdwg.mxu0
    %v108 = vmax.f32 %v105, 0.0
    %v109 = vpack.c.bf16 %v108, %v108
    %v110 = vld [vmem:[#allocation7] sm:$0xf]
    %v111 = vld [vmem:[#allocation7 + $0x4] sm:$0xf]
    %v112 = vld [vmem:[#allocation7 + $0x8] sm:$0xf]
    %v113 = vld [vmem:[#allocation7 + $0xc] sm:$0xf]
    %v114 = vld [vmem:[#allocation7 + $0x10] sm:$0xf]
    %v115 = vld [vmem:[#allocation7 + $0x14] sm:$0xf]
    %v116 = vld [vmem:[#allocation7 + $0x18] sm:$0xf]
    %v117 = vld [vmem:[#allocation7 + $0x1c] sm:$0xf]
    %v118 = vld [vmem:[%s4] sm:$0x1]
    %v120 = vperm.slane %v118, 0
    %v130 = vunpack.c.l.b16 %v110
    %v131 = vunpack.c.l.b16 %v111
    %v132 = vunpack.c.l.b16 %v112
    %v133 = vunpack.c.l.b16 %v113
    %v134 = vunpack.c.l.b16 %v114
    %v135 = vunpack.c.l.b16 %v115
    %v136 = vunpack.c.l.b16 %v116
    %v137 = vunpack.c.l.b16 %v117
    %v138 = vpack.c.b16 %v131, %v130
    %v139 = vpack.c.b16 %v133, %v132
    %v140 = vpack.c.b16 %v135, %v134
    %v141 = vpack.c.b16 %v137, %v136
    %vm146 = vcmask 523264
    %v148 = vsel %vm146, %v109, 0
    %150 = vmatpush.bf16.msra.mxu0 0
    %151 = vmatpush.bf16.msra.mxu0 0
    %152 = vmatpush.bf16.msra.mxu0 0
    %153 = vmatpush.bf16.msra.mxu0 0
    %154 = vmatpush.bf16.msra.mxu0 %v141
    %155 = vmatpush.bf16.msra.mxu0 %v140
    %156 = vmatpush.bf16.msra.mxu0 %v139
    %157 = vmatpush.bf16.msra.mxu0 %v138
    %158 = vmatmul.bf16.gmra.mxu0 %v148
    %v159 = vpop.f32.mrf.mxu0
    %v160 = vadd.f32 %v120, %v159
    %v161 = vpop.f32.mrf.mxu0
    %162 = vdwg.mxu0
    %v163 = vmax.f32 %v160, 0.0
    %vm164 = vcmask 785408
    %165 = vst.msk [vmem:[#allocation8] sm:$0xff] %vm164, %v163
    // Predicated region
    $region34: #{mlp_forward.1} parent=1 // pred_check
      _
    $region35: #{mlp_forward.1} parent=1 // pred_check_branch
      %167 = sbr.rel (0) target = $region37
    $region36: #{mlp_forward.1} parent=1 // pred_region
      %169 = vsyncadd [#allocation4], 96
      %s170 = sshll.u32 [#allocation8], 4
      %s171 = int_to_ptr.vmem [resolvable:$true] %s170
      %s172 = sshll.u32 %s5, 4
      %s173 = int_to_ptr.hbm [resolvable:$true] %s172
      %178 = dma.vmem_to_hbm [thread:$0]  %s171, 32, %s173, [#allocation4], 32, 32, 2
    $region37: #{mlp_forward.1} parent=1 // pred_fallthru
      _
    // Predicated region
    $region38: #{mlp_forward.1} parent=1 // pred_check
      _
    $region39: #{mlp_forward.1} parent=1 // pred_check_branch
      %180 = sbr.rel (0) target = $region41
    $region40: #{mlp_forward.1} parent=1 // pred_region
      %182 = dma.done [#allocation4], 128
    $region41: #{mlp_forward.1} parent=1 // pred_fallthru
      _
    %183 = vsyncpa [#allocation3], 1
    %184 = vsyncpa [#allocation6], 1
    %185 = vsyncpa [#allocation4], 1

</llo_original>
